<compile_context>
chip_gen: v7x
topology: tpu7x:2x2x1
jax: 0.10.0
libtpu: 0.0.40
codegen_flags: <defaults>
</compile_context>

<pallas_src>
import functools

import jax
import jax.numpy as jnp
from jax import lax
from jax.experimental import pallas as pl
from jax.experimental.pallas import tpu as pltpu


def _round_up(x: int, m: int) -> int:
    return ((x + m - 1) // m) * m


def _key_matmul_kernel(x_ref, w_ref, o_ref):
    # x_ref: (tm, K)  tokens x dim_embed strip
    # w_ref: (tn, K)  dim_hidden x dim_embed strip (native nn.Linear layout)
    # o_ref: (tm, tn)
    o_ref[...] = lax.dot_general(
        x_ref[...], w_ref[...],
        dimension_numbers=(((1,), (1,)), ((), ())),
        preferred_element_type=jnp.float32,
    ).astype(o_ref.dtype)


def _key_matmul_acc_kernel(x_ref, w_ref, o_ref, acc_ref):
    # Same as above but with K tiled across grid axis 2; accumulate in f32.
    @pl.when(pl.program_id(2) == 0)
    def _():
        acc_ref[...] = jnp.zeros_like(acc_ref)

    acc_ref[...] += lax.dot_general(
        x_ref[...], w_ref[...],
        dimension_numbers=(((1,), (1,)), ((), ())),
        preferred_element_type=jnp.float32,
    )

    @pl.when(pl.program_id(2) == pl.num_programs(2) - 1)
    def _():
        o_ref[...] = acc_ref[...].astype(o_ref.dtype)


@jax.jit
def key_forward_pallas(x, weight):
    """x: (..., dim_embed), weight: (dim_hidden, dim_embed) -> (..., dim_hidden)."""
    *lead, dim_embed = x.shape
    dim_hidden = weight.shape[0]
    M = 1
    for d in lead:
        M *= d
    K, N = dim_embed, dim_hidden

    x2d = x.reshape(M, K)

    # --- tile sizes (conservative budget: safe on v5e/v6e/v7x VMEM limits) ---
    TM_TARGET, TN_TARGET, TK_TARGET = 256, 256, 512
    MAX_K_UNSPLIT = 2048  # below this, stream full-K strips (no accumulator)

    tm = min(TM_TARGET, _round_up(M, 8))
    tn = min(TN_TARGET, _round_up(N, 128))

    Mp = _round_up(M, tm)
    Np = _round_up(N, tn)

    split_k = K > MAX_K_UNSPLIT
    if split_k:
        tk = TK_TARGET
        Kp = _round_up(K, tk)
    else:
        Kp = _round_up(K, 128)
        tk = Kp

    # Zero-pad to tile boundaries (zero K-padding contributes nothing to x @ W.T).
    xp = jnp.pad(x2d, ((0, Mp - M), (0, Kp - K)))
    wp = jnp.pad(weight, ((0, Np - N), (0, Kp - K)))

    itemsize = jnp.dtype(x.dtype).itemsize
    cost = pl.CostEstimate(
        flops=2 * M * N * K,
        transcendentals=0,
        bytes_accessed=(M * K + N * K + M * N) * itemsize,
    )

    if split_k:
        grid = (Mp // tm, Np // tn, Kp // tk)
        out_p = pl.pallas_call(
            _key_matmul_acc_kernel,
            out_shape=jax.ShapeDtypeStruct((Mp, Np), x.dtype),
            grid_spec=pltpu.PrefetchScalarGridSpec(
                num_scalar_prefetch=0,
                grid=grid,
                in_specs=[
                    pl.BlockSpec((tm, tk), lambda i, j, k: (i, k)),
                    pl.BlockSpec((tn, tk), lambda i, j, k: (j, k)),
                ],
                out_specs=pl.BlockSpec((tm, tn), lambda i, j, k: (i, j)),
                scratch_shapes=[pltpu.VMEM((tm, tn), jnp.float32)],
            ),
            compiler_params=pltpu.CompilerParams(
                dimension_semantics=("parallel", "parallel", "arbitrary"),
            ),
            cost_estimate=cost,
        )(xp, wp)
    else:
        grid = (Mp // tm, Np // tn)
        out_p = pl.pallas_call(
            _key_matmul_kernel,
            out_shape=jax.ShapeDtypeStruct((Mp, Np), x.dtype),
            grid_spec=pltpu.PrefetchScalarGridSpec(
                num_scalar_prefetch=0,
                grid=grid,
                in_specs=[
                    pl.BlockSpec((tm, Kp), lambda i, j: (i, 0)),
                    pl.BlockSpec((tn, Kp), lambda i, j: (j, 0)),
                ],
                out_specs=pl.BlockSpec((tm, tn), lambda i, j: (i, j)),
            ),
            compiler_params=pltpu.CompilerParams(
                dimension_semantics=("parallel", "parallel"),
            ),
            cost_estimate=cost,
        )(xp, wp)

    return out_p[:M, :N].reshape(*lead, N)


def key_forward(x, weight):
    """Dispatch: tiny problems go straight to XLA (Pallas launch overhead
    dominates); everything else runs the Pallas kernel."""
    *lead, dim_embed = x.shape
    dim_hidden = weight.shape[0]
    M = 1
    for d in lead:
        M *= d
    if 2 * M * dim_embed * dim_hidden < (1 << 22):  # < ~4 MFLOP -> pure XLA
        return jnp.einsum("...e,he->...h", x, weight)
    return key_forward_pallas(x, weight)


if __name__ == "__main__":
    # Small shapes consistent with the module: batch=2, seq=8,
    # dim_embed=32, dim_hidden=32.
    batch, seq, dim_embed, dim_hidden = 2, 8, 32, 32

    key = jax.random.PRNGKey(0)
    kx, kw = jax.random.split(key)

    x = jax.random.normal(kx, (batch, seq, dim_embed), dtype=jnp.float32)

    # Deterministic init matching nn.Linear default: U(-1/sqrt(in), 1/sqrt(in))
    bound = 1.0 / (dim_embed ** 0.5)
    weight = jax.random.uniform(
        kw, (dim_hidden, dim_embed), dtype=jnp.float32,
        minval=-bound, maxval=bound,
    )

    # Run the Pallas kernel explicitly (the dispatch wrapper would route this
    # tiny demo shape to plain XLA).
    out = key_forward_pallas(x, weight)
    jax.block_until_ready(out)

    # Correctness check against plain JAX reference (x @ W.T).
    ref = jnp.einsum("bse,he->bsh", x, weight)
    assert out.shape == (batch, seq, dim_hidden)
    assert jnp.allclose(out, ref, atol=1e-5, rtol=1e-5)

    # Also exercise the dispatching wrapper for parity.
    out2 = key_forward(x, weight)
    jax.block_until_ready(out2)
    assert jnp.allclose(out2, ref, atol=1e-5, rtol=1e-5)

    print("KERNEL_OK")
</pallas_src>

<mosaic_0001>
module attributes {stable_mosaic.version = 11 : i64} {
  func.func @_key_matmul_kernel(%arg0: i32, %arg1: i32, %arg2: memref<16x128xf32, #tpu.memory_space<vmem>>, %arg3: memref<128x128xf32, #tpu.memory_space<vmem>>, %arg4: memref<16x128xf32, #tpu.memory_space<vmem>>) attributes {dimension_semantics = [#tpu.dimension_semantics<parallel>, #tpu.dimension_semantics<parallel>], iteration_bounds = array<i64: 1, 1>, scalar_prefetch = 0 : i64, scratch_operands = 0 : i64, tpu.core_type = #tpu.core_type<tc>, window_params = [{transform_indices = @transform_0, window_bounds = array<i64: 16, 128>}, {transform_indices = @transform_1, window_bounds = array<i64: 128, 128>}, {transform_indices = @transform_2, window_bounds = array<i64: 16, 128>}]} {
    %c0 = arith.constant 0 : index
    %c0_0 = arith.constant 0 : index
    %0 = vector.load %arg2[%c0, %c0_0] : memref<16x128xf32, #tpu.memory_space<vmem>>, vector<16x128xf32>
    %c0_1 = arith.constant 0 : index
    %c0_2 = arith.constant 0 : index
    %1 = vector.load %arg3[%c0_1, %c0_2] : memref<128x128xf32, #tpu.memory_space<vmem>>, vector<128x128xf32>
    %cst = arith.constant dense<0.000000e+00> : vector<16x128xf32>
    %2 = tpu.matmul %0, %1, %cst {dimension_numbers = #tpu.dot_dimension_numbers<[1], [1], [0], [0], [0, 0, 1, 0], [], []>} : vector<16x128xf32>, vector<128x128xf32>, vector<16x128xf32> -> vector<16x128xf32>
    %c0_3 = arith.constant 0 : index
    %c0_4 = arith.constant 0 : index
    %3 = vector.load %arg4[%c0_3, %c0_4] : memref<16x128xf32, #tpu.memory_space<vmem>>, vector<16x128xf32>
    tpu.vector_store %arg4[%c0_3, %c0_4], %2 {strides = array<i32>} : memref<16x128xf32, #tpu.memory_space<vmem>>, vector<16x128xf32>,
    return
  }
  func.func @transform_0(%arg0: i32, %arg1: i32) -> (i32, i32) {
    %c0_i32 = arith.constant 0 : i32
    %c0_i32_0 = arith.constant 0 : i32
    return %arg0, %c0_i32 : i32, i32
  }
  func.func @transform_1(%arg0: i32, %arg1: i32) -> (i32, i32) {
    %c0_i32 = arith.constant 0 : i32
    %c0_i32_0 = arith.constant 0 : i32
    return %arg1, %c0_i32 : i32, i32
  }
  func.func @transform_2(%arg0: i32, %arg1: i32) -> (i32, i32) {
    %c0_i32 = arith.constant 0 : i32
    return %arg0, %arg1 : i32, i32
  }
}

</mosaic_0001>

<llo_original>
// kernel: key_forward_pallas.1
$region0: #{key_forward_pallas.1}
  #allocation0 [shape = 'u32[]', space=smem, size = 0x4, offset = 0x4, fixed_abs, tag = 'smem constant byte address 0x4 - core index']
  #allocation1 [shape = 'u32[144,128]{1,0:T(1,128)}', space=vmem, size = 0x12000, scoped, tag = 'internal scratch']
  %s0 = inlined_call_operand.vmem [shape: f32[16,128], index: 0, kind: input, shape index: {}]
  %s1 = inlined_call_operand.vmem [shape: f32[128,128], index: 1, kind: input, shape index: {}]
  %s2 = inlined_call_operand.vmem [shape: f32[16,128], index: 2, kind: output, shape index: {}]
  %s3 = sld [smem:[#allocation0]]
  $region18: #{key_forward_pallas.1} parent=0
    _
  %s5 = ssub.s32 1, %s3
  %s6 = scalar_select 0, %s5, %s3
  // Predicated region
  $region2: #{key_forward_pallas.1} parent=0 // pred_check
    _
  $region3: #{key_forward_pallas.1} parent=0 // pred_check_branch
    %8 = sbr.rel (0) target = $region5
  $region4: #{key_forward_pallas.1} parent=0 // pred_region
    _
  $region5: #{key_forward_pallas.1} parent=0 // pred_fallthru
    _
  // Predicated region
  $region6: #{key_forward_pallas.1} parent=0 // pred_check
    _
  $region7: #{key_forward_pallas.1} parent=0 // pred_check_branch
    %10 = sbr.rel (0) target = $region9
  $region8: #{key_forward_pallas.1} parent=0 // pred_region
    _
  $region9: #{key_forward_pallas.1} parent=0 // pred_fallthru
    _
  %v11 = vld [vmem:[%s0] sm:$0xff]
  %v12 = vld [vmem:[%s0 + $0x8] sm:$0xff]
  %v13 = vld [vmem:[%s1] sm:$0xff]
  %v14 = vld [vmem:[%s1 + $0x8] sm:$0xff]
  %v15 = vld [vmem:[%s1 + $0x10] sm:$0xff]
  %v16 = vld [vmem:[%s1 + $0x18] sm:$0xff]
  %v17 = vld [vmem:[%s1 + $0x20] sm:$0xff]
  %v18 = vld [vmem:[%s1 + $0x28] sm:$0xff]
  %v19 = vld [vmem:[%s1 + $0x30] sm:$0xff]
  %v20 = vld [vmem:[%s1 + $0x38] sm:$0xff]
  %v21 = vld [vmem:[%s1 + $0x40] sm:$0xff]
  %v22 = vld [vmem:[%s1 + $0x48] sm:$0xff]
  %v23 = vld [vmem:[%s1 + $0x50] sm:$0xff]
  %v24 = vld [vmem:[%s1 + $0x58] sm:$0xff]
  %v25 = vld [vmem:[%s1 + $0x60] sm:$0xff]
  %v26 = vld [vmem:[%s1 + $0x68] sm:$0xff]
  %v27 = vld [vmem:[%s1 + $0x70] sm:$0xff]
  %v28 = vld [vmem:[%s1 + $0x78] sm:$0xff]
  %29 = vmatprep.subr.mxu0 0.0
  %30 = vmatpush1.xpose.msra.mxu0 %v13
  %31 = vmatprep.subr.mxu0 0.0
  %32 = vmatpush1.xpose.msra.mxu0 %v14
  %33 = vmatprep.subr.mxu0 0.0
  %34 = vmatpush1.xpose.msra.mxu0 %v15
  %35 = vmatprep.subr.mxu0 0.0
  %36 = vmatpush1.xpose.msra.mxu0 %v16
  %37 = vmatprep.subr.mxu0 0.0
  %38 = vmatpush1.xpose.msra.mxu0 %v17
  %39 = vmatprep.subr.mxu0 0.0
  %40 = vmatpush1.xpose.msra.mxu0 %v18
  %41 = vmatprep.subr.mxu0 0.0
  %42 = vmatpush1.xpose.msra.mxu0 %v19
  %43 = vmatprep.subr.mxu0 0.0
  %44 = vmatpush1.xpose.msra.mxu0 %v20
  %45 = vmatprep.subr.mxu0 0.0
  %46 = vmatpush1.xpose.msra.mxu0 %v21
  %47 = vmatprep.subr.mxu0 0.0
  %48 = vmatpush1.xpose.msra.mxu0 %v22
  %49 = vmatprep.subr.mxu0 0.0
  %50 = vmatpush1.xpose.msra.mxu0 %v23
  %51 = vmatprep.subr.mxu0 0.0
  %52 = vmatpush1.xpose.msra.mxu0 %v24
  %53 = vmatprep.subr.mxu0 0.0
  %54 = vmatpush1.xpose.msra.mxu0 %v25
  %55 = vmatprep.subr.mxu0 0.0
  %56 = vmatpush1.xpose.msra.mxu0 %v26
  %57 = vmatprep.subr.mxu0 0.0
  %58 = vmatpush1.xpose.msra.mxu0 %v27
  %59 = vmatprep.subr.mxu0 0.0
  %60 = vmatpush1.xpose.msra.mxu0 %v28
  %61 = vmatprep.subr.mxu0 0.0
  %62 = vmatpush1.xpose.msra.mxu0 0.0
  %63 = vmatprep.subr.mxu0 0.0
  %64 = vmatpush1.xpose.msra.mxu0 0.0
  %65 = vmatprep.subr.mxu0 0.0
  %66 = vmatpush1.xpose.msra.mxu0 0.0
  %67 = vmatprep.subr.mxu0 0.0
  %68 = vmatpush1.xpose.msra.mxu0 0.0
  %69 = vmatprep.subr.mxu0 0.0
  %70 = vmatpush1.xpose.msra.mxu0 0.0
  %71 = vmatprep.subr.mxu0 0.0
  %72 = vmatpush1.xpose.msra.mxu0 0.0
  %73 = vmatprep.subr.mxu0 0.0
  %74 = vmatpush1.xpose.msra.mxu0 0.0
  %75 = vmatprep.subr.mxu0 0.0
  %76 = vmatpush1.xpose.msra.mxu0 0.0
  %77 = vmatprep.subr.mxu0 0.0
  %78 = vmatpush1.xpose.msra.mxu0 0.0
  %79 = vmatprep.subr.mxu0 0.0
  %80 = vmatpush1.xpose.msra.mxu0 0.0
  %81 = vmatprep.subr.mxu0 0.0
  %82 = vmatpush1.xpose.msra.mxu0 0.0
  %83 = vmatprep.subr.mxu0 0.0
  %84 = vmatpush1.xpose.msra.mxu0 0.0
  %85 = vmatprep.subr.mxu0 0.0
  %86 = vmatpush1.xpose.msra.mxu0 0.0
  %87 = vmatprep.subr.mxu0 0.0
  %88 = vmatpush1.xpose.msra.mxu0 0.0
  %89 = vmatprep.subr.mxu0 0.0
  %90 = vmatpush1.xpose.msra.mxu0 0.0
  %91 = vmatprep.subr.mxu0 0.0
  %92 = vmatpush1.xpose.msra.mxu0 0.0
  %93 = vmatprep.mubr.f32.mxu0 0.0
  %94 = vmatmul.mubr.f32.gmra.mrb[0].mxu0 %v11
  %v95 = vpop.f32.mrb[0].mxu0
  %v96 = vadd.f32 0.0, %v95
  %v97 = vpop.f32.mrb[0].mxu0
  %98 = vmatprep.mubr.f32.mxu0 0.0
  %99 = vmatmul.mubr.f32.gmra.mrb[0].mxu0 %v12
  %v100 = vpop.f32.mrb[0].mxu0
  %v101 = vadd.f32 0.0, %v100
  %v102 = vpop.f32.mrb[0].mxu0
  %103 = vdwg.mxu0
  %104 = vst [vmem:[%s2] sm:$0xff] %v96
  %105 = vst [vmem:[%s2 + $0x8] sm:$0xff] %v101
  // Predicated region
  $region10: #{key_forward_pallas.1} parent=0 // pred_check
    _
  $region11: #{key_forward_pallas.1} parent=0 // pred_check_branch
    %107 = sbr.rel (0) target = $region13
  $region12: #{key_forward_pallas.1} parent=0 // pred_region
    _
  $region13: #{key_forward_pallas.1} parent=0 // pred_fallthru
    _
  // Predicated region
  $region14: #{key_forward_pallas.1} parent=0 // pred_check
    _
  $region15: #{key_forward_pallas.1} parent=0 // pred_check_branch
    %109 = sbr.rel (0) target = $region17
  $region16: #{key_forward_pallas.1} parent=0 // pred_region
    _
  $region17: #{key_forward_pallas.1} parent=0 // pred_fallthru
    _

</llo_original>
